<compile_context>
chip_gen: v7x
topology: tpu7x:2x2x1
jax: 0.10.0
libtpu: 0.0.40
codegen_flags: <defaults>
</compile_context>

<pallas_src>
import functools

import jax
import jax.numpy as jnp
from jax.experimental import pallas as pl
from jax.experimental.pallas import tpu as pltpu


_LANE = 128
_MAX_TN = 16384                    # lane-tile cap (multiple of 128)
_MAX_BB = 8                        # batch elements per grid step (bounds unroll)
_CHUNK = 2048                      # in-kernel compute chunk (lanes)
_SMALL_BYTES = 4 * 1024 * 1024     # single-step fast-path threshold
_DEFAULT_VMEM = 64 * 1024 * 1024   # conservative physical-VMEM fallback (v7x)


def _vmem_capacity_bytes():
    """Physical VMEM of the local TPU (falls back to the v7x-safe 64 MiB)."""
    try:
        info = pltpu.get_tpu_info()
        cap = getattr(info, "vmem_capacity_bytes", None)
        if cap:
            return int(cap)
    except Exception:
        pass
    return _DEFAULT_VMEM


def _round_up(x, m):
    return ((x + m - 1) // m) * m


def _graspable_kernel(x_ref, w_ref, b_ref, obj_ref, grasp_ref, *, bb, tn, chunk):
    """Project one (bb, C, tn) tile: res = W @ x + bias, split into 2/1 rows.

    x_ref:     (bb, C, tn)
    w_ref:     (3, C)     conv1d weight (kernel_size=1 squeezed)
    b_ref:     (3, 1)     conv1d bias (f32), broadcast over lanes
    obj_ref:   (bb, 2, tn)
    grasp_ref: (bb, 1, tn)
    """
    w = w_ref[...]
    b = b_ref[...]
    for bi in range(bb):                     # small, static -> unrolled
        for c0 in range(0, tn, chunk):       # bound vreg live ranges per dot
            sz = min(chunk, tn - c0)
            res = jnp.dot(w, x_ref[bi, :, c0:c0 + sz],
                          preferred_element_type=jnp.float32) + b
            obj_ref[bi, :, c0:c0 + sz] = res[:2, :].astype(obj_ref.dtype)
            grasp_ref[bi, :, c0:c0 + sz] = res[2:3, :].astype(grasp_ref.dtype)


def _choose_tiles(b, c, n, itemsize, tile_budget):
    """Pick (batch_block, lane_tile) so one step's working set ~= tile_budget.

    TN is either the full N (always a legal block) or a multiple of 128 (the
    ragged tail is handled by the cdiv grid). BB amortizes the per-step
    pipeline overhead when individual batch elements are small.
    """
    per_col = (c + 3) * itemsize                 # x column + 3 output rows
    max_cols = max(_LANE, tile_budget // per_col)
    max_tn = min(_MAX_TN, max(_LANE, (max_cols // _LANE) * _LANE))
    tn = n if n <= max_tn else max_tn
    bb = 1
    if b > 1:
        bb = max(1, min(b, _MAX_BB, max_cols // max(tn, 1)))
    return bb, tn


def graspable_net_forward(seed_features, weight, bias, end_points=None,
                          *, force_tiled=False):
    """Pallas implementation of GraspableNet.forward.

    seed_features: (B, C, N)   (bf16 inputs recommended for 2x HBM savings)
    weight:        (3, C, 1)   Conv1d weight, kernel_size=1
    bias:          (3,)
    Returns end_points with 'objectness_score' (B, 2, N) and
    'graspness_score' (B, N), matching the PyTorch semantics.
    """
    if end_points is None:
        end_points = {}

    B, C, N = seed_features.shape
    dtype = seed_features.dtype
    itemsize = jnp.dtype(dtype).itemsize

    w2d = weight.reshape(3, C).astype(dtype)        # weights follow input dtype
    b2d = bias.reshape(3, 1).astype(jnp.float32)    # bias added in f32

    out_shapes = (
        jax.ShapeDtypeStruct((B, 2, N), dtype),     # objectness_score
        jax.ShapeDtypeStruct((B, 1, N), dtype),     # graspness (squeezed later)
    )
    cost = pl.CostEstimate(
        flops=2 * 3 * C * N * B,
        transcendentals=0,
        bytes_accessed=itemsize * (B * N * (C + 3)) + 4 * (3 * C + 3),
    )

    vmem_cap = _vmem_capacity_bytes()
    # Single-buffer working-set budget per grid step: 8 MiB on v7x (64 MiB
    # VMEM), 16 MiB on v5e/v6e (128 MiB). Double-buffered this stays <= cap/4.
    tile_budget = max(2 * 1024 * 1024, vmem_cap // 8)
    vmem_limit = min(vmem_cap - vmem_cap // 4, 64 * 1024 * 1024)

    total_bytes = B * N * (C + 3) * itemsize
    use_small = (
        (not force_tiled)
        and total_bytes <= _SMALL_BYTES
        and B <= 64
        and B * pl.cdiv(N, _CHUNK) <= 128       # keep the static unroll bounded
    )

    if use_small:
        # Single grid step: one DMA in / out, no per-step pipeline overhead.
        obj, grasp = pl.pallas_call(
            functools.partial(_graspable_kernel, bb=B, tn=N,
                              chunk=min(N, _CHUNK)),
            out_shape=out_shapes,
            compiler_params=pltpu.CompilerParams(vmem_limit_bytes=vmem_limit),
            cost_estimate=cost,
        )(seed_features, w2d, b2d)
    else:
        bb, tn = _choose_tiles(B, C, N, itemsize, tile_budget)
        # If the grid collapses to one step, split it so the two TensorCores
        # of a v7x chip both get work (no effect on single-TC v5e/v6e).
        if pl.cdiv(B, bb) * pl.cdiv(N, tn) == 1:
            if bb >= 2:
                bb = (bb + 1) // 2
            elif N >= 2 * _LANE:
                tn = _round_up(pl.cdiv(N, 2), _LANE)
        grid = (pl.cdiv(B, bb), pl.cdiv(N, tn))

        obj, grasp = pl.pallas_call(
            functools.partial(_graspable_kernel, bb=bb, tn=tn,
                              chunk=min(tn, _CHUNK)),
            out_shape=out_shapes,
            grid_spec=pltpu.PrefetchScalarGridSpec(
                num_scalar_prefetch=0,
                grid=grid,
                in_specs=[
                    pl.BlockSpec((bb, C, tn), lambda b, n: (b, 0, n)),  # x tile
                    pl.BlockSpec((3, C), lambda b, n: (0, 0)),          # weight
                    pl.BlockSpec((3, 1), lambda b, n: (0, 0)),          # bias
                ],
                out_specs=[
                    pl.BlockSpec((bb, 2, tn), lambda b, n: (b, 0, n)),  # objectness
                    pl.BlockSpec((bb, 1, tn), lambda b, n: (b, 0, n)),  # graspness
                ],
            ),
            compiler_params=pltpu.CompilerParams(
                dimension_semantics=("parallel", "parallel"),
                vmem_limit_bytes=vmem_limit,
            ),
            cost_estimate=cost,
        )(seed_features, w2d, b2d)

    end_points["objectness_score"] = obj
    end_points["graspness_score"] = grasp.reshape(B, N)  # metadata-only squeeze
    return end_points


if __name__ == "__main__":
    seed_feature_dim = 32   # C
    batch = 2               # B
    num_seed = 128          # N (points)

    key = jax.random.PRNGKey(0)
    k_x, k_w, k_b = jax.random.split(key, 3)

    seed_features = jax.random.normal(
        k_x, (batch, seed_feature_dim, num_seed), dtype=jnp.float32
    )
    weight = jax.random.normal(
        k_w, (3, seed_feature_dim, 1), dtype=jnp.float32
    ) * 0.1
    bias = jax.random.normal(k_b, (3,), dtype=jnp.float32) * 0.1

    # Reference: Conv1d(k=1) == matmul over channels.
    ref = (
        jnp.einsum("oc,bcn->bon", weight.reshape(3, seed_feature_dim), seed_features)
        + bias.reshape(1, 3, 1)
    )

    # Small-workload path (single grid step).
    ep_small = graspable_net_forward(seed_features, weight, bias, {})
    jax.block_until_ready(ep_small["objectness_score"])
    jax.block_until_ready(ep_small["graspness_score"])

    # General tiled path, exercised explicitly at the same small shape.
    ep_tiled = graspable_net_forward(
        seed_features, weight, bias, {}, force_tiled=True
    )
    jax.block_until_ready(ep_tiled["objectness_score"])
    jax.block_until_ready(ep_tiled["graspness_score"])

    for ep in (ep_small, ep_tiled):
        assert ep["objectness_score"].shape == (batch, 2, num_seed)
        assert ep["graspness_score"].shape == (batch, num_seed)
        assert jnp.allclose(ep["objectness_score"], ref[:, :2], atol=1e-4)
        assert jnp.allclose(ep["graspness_score"], ref[:, 2], atol=1e-4)

    print("KERNEL_OK")
</pallas_src>

<mosaic_0001>
module attributes {stable_mosaic.version = 11 : i64} {
  func.func @_graspable_kernel(%arg0: memref<2x32x128xf32, #tpu.memory_space<vmem>>, %arg1: memref<3x32xf32, #tpu.memory_space<vmem>>, %arg2: memref<3x1xf32, #tpu.memory_space<vmem>>, %arg3: memref<2x2x128xf32, #tpu.memory_space<vmem>>, %arg4: memref<2x1x128xf32, #tpu.memory_space<vmem>>) attributes {dimension_semantics = [], scalar_prefetch = 0 : i64, scratch_operands = 0 : i64, tpu.core_type = #tpu.core_type<tc>} {
    %c0 = arith.constant 0 : index
    %c0_0 = arith.constant 0 : index
    %0 = vector.load %arg1[%c0, %c0_0] : memref<3x32xf32, #tpu.memory_space<vmem>>, vector<3x32xf32>
    %c0_1 = arith.constant 0 : index
    %c0_2 = arith.constant 0 : index
    %1 = vector.load %arg2[%c0_1, %c0_2] : memref<3x1xf32, #tpu.memory_space<vmem>>, vector<3x1xf32>
    %c0_3 = arith.constant 0 : index
    %c0_4 = arith.constant 0 : index
    %c0_5 = arith.constant 0 : index
    %2 = vector.load %arg0[%c0_3, %c0_4, %c0_5] : memref<2x32x128xf32, #tpu.memory_space<vmem>>, vector<1x32x128xf32>
    %3 = vector.shape_cast %2 : vector<1x32x128xf32> to vector<32x128xf32>
    %cst = arith.constant dense<0.000000e+00> : vector<3x128xf32>
    %4 = tpu.matmul %0, %3, %cst {dimension_numbers = #tpu.dot_dimension_numbers<[1], [0], [0], [1], [0, 0, 1, 1], [], []>} : vector<3x32xf32>, vector<32x128xf32>, vector<3x128xf32> -> vector<3x128xf32>
    %5 = vector.broadcast %1 : vector<3x1xf32> to vector<3x128xf32>
    %6 = arith.addf %4, %5 : vector<3x128xf32>
    %7 = vector.extract_strided_slice %6 {offsets = [0, 0], sizes = [2, 128], strides = [1, 1]} : vector<3x128xf32> to vector<2x128xf32>
    %c0_6 = arith.constant 0 : index
    %c0_7 = arith.constant 0 : index
    %c0_8 = arith.constant 0 : index
    %8 = vector.load %arg3[%c0_6, %c0_7, %c0_8] : memref<2x2x128xf32, #tpu.memory_space<vmem>>, vector<1x2x128xf32>
    %9 = vector.shape_cast %8 : vector<1x2x128xf32> to vector<2x128xf32>
    %10 = vector.shape_cast %7 : vector<2x128xf32> to vector<1x2x128xf32>
    tpu.vector_store %arg3[%c0_6, %c0_7, %c0_8], %10 {strides = array<i32>} : memref<2x2x128xf32, #tpu.memory_space<vmem>>, vector<1x2x128xf32>,
    %11 = vector.extract_strided_slice %6 {offsets = [2, 0], sizes = [1, 128], strides = [1, 1]} : vector<3x128xf32> to vector<1x128xf32>
    %c0_9 = arith.constant 0 : index
    %c0_10 = arith.constant 0 : index
    %c0_11 = arith.constant 0 : index
    %12 = vector.load %arg4[%c0_9, %c0_10, %c0_11] : memref<2x1x128xf32, #tpu.memory_space<vmem>>, vector<1x1x128xf32>
    %13 = vector.shape_cast %12 : vector<1x1x128xf32> to vector<1x128xf32>
    %14 = vector.shape_cast %11 : vector<1x128xf32> to vector<1x1x128xf32>
    tpu.vector_store %arg4[%c0_9, %c0_10, %c0_11], %14 {strides = array<i32>} : memref<2x1x128xf32, #tpu.memory_space<vmem>>, vector<1x1x128xf32>,
    %c1 = arith.constant 1 : index
    %c0_12 = arith.constant 0 : index
    %c0_13 = arith.constant 0 : index
    %15 = vector.load %arg0[%c1, %c0_12, %c0_13] : memref<2x32x128xf32, #tpu.memory_space<vmem>>, vector<1x32x128xf32>
    %16 = vector.shape_cast %15 : vector<1x32x128xf32> to vector<32x128xf32>
    %cst_14 = arith.constant dense<0.000000e+00> : vector<3x128xf32>
    %17 = tpu.matmul %0, %16, %cst_14 {dimension_numbers = #tpu.dot_dimension_numbers<[1], [0], [0], [1], [0, 0, 1, 1], [], []>} : vector<3x32xf32>, vector<32x128xf32>, vector<3x128xf32> -> vector<3x128xf32>
    %18 = vector.broadcast %1 : vector<3x1xf32> to vector<3x128xf32>
    %19 = arith.addf %17, %18 : vector<3x128xf32>
    %20 = vector.extract_strided_slice %19 {offsets = [0, 0], sizes = [2, 128], strides = [1, 1]} : vector<3x128xf32> to vector<2x128xf32>
    %c1_15 = arith.constant 1 : index
    %c0_16 = arith.constant 0 : index
    %c0_17 = arith.constant 0 : index
    %21 = vector.load %arg3[%c1_15, %c0_16, %c0_17] : memref<2x2x128xf32, #tpu.memory_space<vmem>>, vector<1x2x128xf32>
    %22 = vector.shape_cast %21 : vector<1x2x128xf32> to vector<2x128xf32>
    %23 = vector.shape_cast %20 : vector<2x128xf32> to vector<1x2x128xf32>
    tpu.vector_store %arg3[%c1_15, %c0_16, %c0_17], %23 {strides = array<i32>} : memref<2x2x128xf32, #tpu.memory_space<vmem>>, vector<1x2x128xf32>,
    %24 = vector.extract_strided_slice %19 {offsets = [2, 0], sizes = [1, 128], strides = [1, 1]} : vector<3x128xf32> to vector<1x128xf32>
    %c1_18 = arith.constant 1 : index
    %c0_19 = arith.constant 0 : index
    %c0_20 = arith.constant 0 : index
    %25 = vector.load %arg4[%c1_18, %c0_19, %c0_20] : memref<2x1x128xf32, #tpu.memory_space<vmem>>, vector<1x1x128xf32>
    %26 = vector.shape_cast %25 : vector<1x1x128xf32> to vector<1x128xf32>
    %27 = vector.shape_cast %24 : vector<1x128xf32> to vector<1x1x128xf32>
    tpu.vector_store %arg4[%c1_18, %c0_19, %c0_20], %27 {strides = array<i32>} : memref<2x1x128xf32, #tpu.memory_space<vmem>>, vector<1x1x128xf32>,
    return
  }
}

</mosaic_0001>

<llo_original>
// kernel: tpu_custom_call.1
$region0: #{tpu_custom_call.1}
  #allocation0 [shape = 'u32[]', space=smem, size = 0x4, offset = 0x4, fixed_abs, tag = 'smem constant byte address 0x4 - core index']
  #allocation1 [shape = 'u32[144,128]{1,0:T(1,128)}', space=vmem, size = 0x12000, scoped, tag = 'internal scratch']
  %s0 = inlined_call_operand.hbm [shape: f32[2,32,128], index: 0, kind: input, shape index: {}]
  %s1 = inlined_call_operand.vmem [shape: f32[3,32], index: 1, kind: input, shape index: {}]
  %s2 = inlined_call_operand.vmem [shape: f32[3,1], index: 2, kind: input, shape index: {}]
  %s3 = inlined_call_operand.hbm [shape: f32[2,2,128], index: 3, kind: output, shape index: {0}]
  %s4 = inlined_call_operand.hbm [shape: f32[2,1,128], index: 4, kind: output, shape index: {1}]
  %5 = xla_tuple %s3, %s4
  %s6 = sld [smem:[#allocation0]]
  $region34: #{tpu_custom_call.1} parent=0
    _
  %s8 = ssub.s32 1, %s6
  %s9 = scalar_select 0, %s8, %s6
  $region1: #{tpu_custom_call.1} parent=0
    #allocation2 [shape = 'u8[32768]{0}', space=vmem, size = 0x8000, scoped, tag = 'input window, operand 0, single buffered']
    #allocation3 [shape = 's32[1]{0}', space=sflag, size = 0x4, scoped, tag = 'scoped memory for tpu_custom_call.1']
    #allocation4 [shape = 's32[1]{0}', space=sflag, size = 0x4, scoped, tag = 'scoped memory for tpu_custom_call.1']
    #allocation5 [shape = 'u8[2048]{0}', space=vmem, size = 0x800, scoped, tag = 'output window, operand 0, single buffered']
    #allocation6 [shape = 'u8[1024]{0}', space=vmem, size = 0x400, scoped, tag = 'output window, operand 1, single buffered']
    #allocation7 [shape = 's32[1]{0}', space=sflag, size = 0x4, scoped, tag = 'scoped memory for tpu_custom_call.1']
    %10 = vsyncpa [#allocation3], 0
    %11 = vsyncpa [#allocation4], 0
    %12 = vsyncpa [#allocation7], 0
    // Predicated region
    $region2: #{tpu_custom_call.1} parent=1 // pred_check
      _
    $region3: #{tpu_custom_call.1} parent=1 // pred_check_branch
      %14 = sbr.rel (0) target = $region5
    $region4: #{tpu_custom_call.1} parent=1 // pred_region
      %s16 = ssub.s32 1024, 1024
      %17 = vsyncadd [#allocation3], %s16
      %s18 = sshll.u32 [#allocation2], 4
      %s19 = int_to_ptr.vmem [resolvable:$true] %s18
      %24 = dma.hbm_to_vmem [thread:$0]  %s0, 1024, %s19, [#allocation3], 128, 128, 8
    $region5: #{tpu_custom_call.1} parent=1 // pred_fallthru
      _
    // Predicated region
    $region6: #{tpu_custom_call.1} parent=1 // pred_check
      _
    $region7: #{tpu_custom_call.1} parent=1 // pred_check_branch
      %26 = sbr.rel (0) target = $region9
    $region8: #{tpu_custom_call.1} parent=1 // pred_region
      _
    $region9: #{tpu_custom_call.1} parent=1 // pred_fallthru
      _
    // Predicated region
    $region10: #{tpu_custom_call.1} parent=1 // pred_check
      _
    $region11: #{tpu_custom_call.1} parent=1 // pred_check_branch
      %28 = sbr.rel (0) target = $region13
    $region12: #{tpu_custom_call.1} parent=1 // pred_region
      _
    $region13: #{tpu_custom_call.1} parent=1 // pred_fallthru
      _
    // Predicated region
    $region14: #{tpu_custom_call.1} parent=1 // pred_check
      _
    $region15: #{tpu_custom_call.1} parent=1 // pred_check_branch
      %30 = sbr.rel (0) target = $region17
    $region16: #{tpu_custom_call.1} parent=1 // pred_region
      %31 = dma.done [#allocation3], 1024
    $region17: #{tpu_custom_call.1} parent=1 // pred_fallthru
      _
    %v32 = vld [vmem:[%s1] sm:$0x7]
    %v33 = vld [vmem:[%s2] sm:$0x7]
    %v34 = vld [vmem:[#allocation2] sm:$0xff]
    %v35 = vld [vmem:[#allocation2 + $0x8] sm:$0xff]
    %v36 = vld [vmem:[#allocation2 + $0x10] sm:$0xff]
    %v37 = vld [vmem:[#allocation2 + $0x18] sm:$0xff]
    %39 = vset.pattern.permute.xlu0 0
    %40 = vperm.xlu0 %39, %v33
    %v41 = vpop.permute.xlu0 %40
    %vm43 = vcmask 261120
    %v45 = vsel %vm43, %v32, 0
    %47 = vmatprep.subr.mxu0 0.0
    %48 = vmatpush1.msra.mxu0 %v34
    %49 = vmatprep.subr.mxu0 0.0
    %50 = vmatpush1.msra.mxu0 %v35
    %51 = vmatprep.subr.mxu0 0.0
    %52 = vmatpush1.msra.mxu0 %v36
    %53 = vmatprep.subr.mxu0 0.0
    %54 = vmatpush1.msra.mxu0 %v37
    %55 = vmatprep.subr.mxu0 0.0
    %56 = vmatpush1.msra.mxu0 0.0
    %57 = vmatprep.subr.mxu0 0.0
    %58 = vmatpush1.msra.mxu0 0.0
    %59 = vmatprep.subr.mxu0 0.0
    %60 = vmatpush1.msra.mxu0 0.0
    %61 = vmatprep.subr.mxu0 0.0
    %62 = vmatpush1.msra.mxu0 0.0
    %63 = vmatprep.subr.mxu0 0.0
    %64 = vmatpush1.msra.mxu0 0.0
    %65 = vmatprep.subr.mxu0 0.0
    %66 = vmatpush1.msra.mxu0 0.0
    %67 = vmatprep.subr.mxu0 0.0
    %68 = vmatpush1.msra.mxu0 0.0
    %69 = vmatprep.subr.mxu0 0.0
    %70 = vmatpush1.msra.mxu0 0.0
    %71 = vmatprep.subr.mxu0 0.0
    %72 = vmatpush1.msra.mxu0 0.0
    %73 = vmatprep.subr.mxu0 0.0
    %74 = vmatpush1.msra.mxu0 0.0
    %75 = vmatprep.subr.mxu0 0.0
    %76 = vmatpush1.msra.mxu0 0.0
    %77 = vmatprep.subr.mxu0 0.0
    %78 = vmatpush1.msra.mxu0 0.0
    %79 = vmatprep.subr.mxu0 0.0
    %80 = vmatpush1.msra.mxu0 0.0
    %81 = vmatprep.subr.mxu0 0.0
    %82 = vmatpush1.msra.mxu0 0.0
    %83 = vmatprep.subr.mxu0 0.0
    %84 = vmatpush1.msra.mxu0 0.0
    %85 = vmatprep.subr.mxu0 0.0
    %86 = vmatpush1.msra.mxu0 0.0
    %87 = vmatprep.subr.mxu0 0.0
    %88 = vmatpush1.msra.mxu0 0.0
    %89 = vmatprep.subr.mxu0 0.0
    %90 = vmatpush1.msra.mxu0 0.0
    %91 = vmatprep.subr.mxu0 0.0
    %92 = vmatpush1.msra.mxu0 0.0
    %93 = vmatprep.subr.mxu0 0.0
    %94 = vmatpush1.msra.mxu0 0.0
    %95 = vmatprep.subr.mxu0 0.0
    %96 = vmatpush1.msra.mxu0 0.0
    %97 = vmatprep.subr.mxu0 0.0
    %98 = vmatpush1.msra.mxu0 0.0
    %99 = vmatprep.subr.mxu0 0.0
    %100 = vmatpush1.msra.mxu0 0.0
    %101 = vmatprep.subr.mxu0 0.0
    %102 = vmatpush1.msra.mxu0 0.0
    %103 = vmatprep.subr.mxu0 0.0
    %104 = vmatpush1.msra.mxu0 0.0
    %105 = vmatprep.subr.mxu0 0.0
    %106 = vmatpush1.msra.mxu0 0.0
    %107 = vmatprep.subr.mxu0 0.0
    %108 = vmatpush1.msra.mxu0 0.0
    %109 = vmatprep.subr.mxu0 0.0
    %110 = vmatpush1.msra.mxu0 0.0
    %111 = vmatprep.mubr.f32.mxu0 0.0
    %112 = vmatmul.mubr.f32.gmra.mrb[0].mxu0 %v45
    %v113 = vpop.f32.mrb[0].mxu0
    %v114 = vadd.f32 %v41, %v113
    %v115 = vpop.f32.mrb[0].mxu0
    %116 = vdwg.mxu0
    %117 = vst [vmem:[#allocation5] sm:$0x3] %v114
    %118 = vst [vmem:[#allocation6 - $0x2] sm:$0x4] %v114
    %s119 = scalar_lea.vmem [#allocation2], 32
    %v120 = vld [vmem:[%s119] sm:$0xff]
    %v121 = vld [vmem:[%s119 + $0x8] sm:$0xff]
    %v122 = vld [vmem:[%s119 + $0x10] sm:$0xff]
    %v123 = vld [vmem:[%s119 + $0x18] sm:$0xff]
    %124 = vmatprep.subr.mxu0 0.0
    %125 = vmatpush1.msra.mxu0 %v120
    %126 = vmatprep.subr.mxu0 0.0
    %127 = vmatpush1.msra.mxu0 %v121
    %128 = vmatprep.subr.mxu0 0.0
    %129 = vmatpush1.msra.mxu0 %v122
    %130 = vmatprep.subr.mxu0 0.0
    %131 = vmatpush1.msra.mxu0 %v123
    %132 = vmatprep.subr.mxu0 0.0
    %133 = vmatpush1.msra.mxu0 0.0
    %134 = vmatprep.subr.mxu0 0.0
    %135 = vmatpush1.msra.mxu0 0.0
    %136 = vmatprep.subr.mxu0 0.0
    %137 = vmatpush1.msra.mxu0 0.0
    %138 = vmatprep.subr.mxu0 0.0
    %139 = vmatpush1.msra.mxu0 0.0
    %140 = vmatprep.subr.mxu0 0.0
    %141 = vmatpush1.msra.mxu0 0.0
    %142 = vmatprep.subr.mxu0 0.0
    %143 = vmatpush1.msra.mxu0 0.0
    %144 = vmatprep.subr.mxu0 0.0
    %145 = vmatpush1.msra.mxu0 0.0
    %146 = vmatprep.subr.mxu0 0.0
    %147 = vmatpush1.msra.mxu0 0.0
    %148 = vmatprep.subr.mxu0 0.0
    %149 = vmatpush1.msra.mxu0 0.0
    %150 = vmatprep.subr.mxu0 0.0
    %151 = vmatpush1.msra.mxu0 0.0
    %152 = vmatprep.subr.mxu0 0.0
    %153 = vmatpush1.msra.mxu0 0.0
    %154 = vmatprep.subr.mxu0 0.0
    %155 = vmatpush1.msra.mxu0 0.0
    %156 = vmatprep.subr.mxu0 0.0
    %157 = vmatpush1.msra.mxu0 0.0
    %158 = vmatprep.subr.mxu0 0.0
    %159 = vmatpush1.msra.mxu0 0.0
    %160 = vmatprep.subr.mxu0 0.0
    %161 = vmatpush1.msra.mxu0 0.0
    %162 = vmatprep.subr.mxu0 0.0
    %163 = vmatpush1.msra.mxu0 0.0
    %164 = vmatprep.subr.mxu0 0.0
    %165 = vmatpush1.msra.mxu0 0.0
    %166 = vmatprep.subr.mxu0 0.0
    %167 = vmatpush1.msra.mxu0 0.0
    %168 = vmatprep.subr.mxu0 0.0
    %169 = vmatpush1.msra.mxu0 0.0
    %170 = vmatprep.subr.mxu0 0.0
    %171 = vmatpush1.msra.mxu0 0.0
    %172 = vmatprep.subr.mxu0 0.0
    %173 = vmatpush1.msra.mxu0 0.0
    %174 = vmatprep.subr.mxu0 0.0
    %175 = vmatpush1.msra.mxu0 0.0
    %176 = vmatprep.subr.mxu0 0.0
    %177 = vmatpush1.msra.mxu0 0.0
    %178 = vmatprep.subr.mxu0 0.0
    %179 = vmatpush1.msra.mxu0 0.0
    %180 = vmatprep.subr.mxu0 0.0
    %181 = vmatpush1.msra.mxu0 0.0
    %182 = vmatprep.subr.mxu0 0.0
    %183 = vmatpush1.msra.mxu0 0.0
    %184 = vmatprep.subr.mxu0 0.0
    %185 = vmatpush1.msra.mxu0 0.0
    %186 = vmatprep.subr.mxu0 0.0
    %187 = vmatpush1.msra.mxu0 0.0
    %188 = vmatprep.mubr.f32.mxu0 0.0
    %189 = vmatmul.mubr.f32.gmra.mrb[0].mxu0 %v45
    %v190 = vpop.f32.mrb[0].mxu0
    %v191 = vadd.f32 %v41, %v190
    %v192 = vpop.f32.mrb[0].mxu0
    %193 = vdwg.mxu0
    %s194 = scalar_lea.vmem [#allocation5], 2
    %195 = vst [vmem:[%s194] sm:$0x3] %v191
    %s196 = scalar_lea.vmem [#allocation6], 1
    %197 = vst [vmem:[%s196 - $0x2] sm:$0x4] %v191
    // Predicated region
    $region18: #{tpu_custom_call.1} parent=1 // pred_check
      _
    $region19: #{tpu_custom_call.1} parent=1 // pred_check_branch
      %199 = sbr.rel (0) target = $region21
    $region20: #{tpu_custom_call.1} parent=1 // pred_region
      %s201 = ssub.s32 64, 64
      %202 = vsyncadd [#allocation4], %s201
      %s203 = sshll.u32 [#allocation5], 4
      %s204 = int_to_ptr.vmem [resolvable:$true] %s203
      %209 = dma.vmem_to_hbm [thread:$0]  %s204, 64, %s3, [#allocation4], 32, 32, 2
    $region21: #{tpu_custom_call.1} parent=1 // pred_fallthru
      _
    // Predicated region
    $region22: #{tpu_custom_call.1} parent=1 // pred_check
      _
    $region23: #{tpu_custom_call.1} parent=1 // pred_check_branch
      %211 = sbr.rel (0) target = $region25
    $region24: #{tpu_custom_call.1} parent=1 // pred_region
      %s213 = ssub.s32 32, 32
      %214 = vsyncadd [#allocation7], %s213
      %s215 = sshll.u32 [#allocation6], 4
      %s216 = int_to_ptr.vmem [resolvable:$true] %s215
      %221 = dma.vmem_to_hbm [thread:$0]  %s216, 32, %s4, [#allocation7], 16, 16, 1
    $region25: #{tpu_custom_call.1} parent=1 // pred_fallthru
      _
    // Predicated region
    $region26: #{tpu_custom_call.1} parent=1 // pred_check
      _
    $region27: #{tpu_custom_call.1} parent=1 // pred_check_branch
      %223 = sbr.rel (0) target = $region29
    $region28: #{tpu_custom_call.1} parent=1 // pred_region
      %224 = dma.done [#allocation4], 64
    $region29: #{tpu_custom_call.1} parent=1 // pred_fallthru
      _
    // Predicated region
    $region30: #{tpu_custom_call.1} parent=1 // pred_check
      _
    $region31: #{tpu_custom_call.1} parent=1 // pred_check_branch
      %226 = sbr.rel (0) target = $region33
    $region32: #{tpu_custom_call.1} parent=1 // pred_region
      %227 = dma.done [#allocation7], 32
    $region33: #{tpu_custom_call.1} parent=1 // pred_fallthru
      _
    %228 = vsyncpa [#allocation3], 1
    %229 = vsyncpa [#allocation4], 1
    %230 = vsyncpa [#allocation7], 1

</llo_original>
